<compile_context>
chip_gen: v5e
topology: v5e:2x2
jax: 0.10.0
libtpu: 0.0.40
codegen_flags: <defaults>
</compile_context>

<pallas_src>
import functools
from math import sqrt

import jax
import jax.numpy as jnp
from jax.experimental import pallas as pl
from jax.experimental.pallas import tpu as pltpu


def _round_up(x, m):
    return (x + m - 1) // m * m


def _layer_norm_f32(x, gamma, beta, eps):
    xf = x.astype(jnp.float32)
    mu = jnp.mean(xf, axis=-1, keepdims=True)
    xc = xf - mu
    var = jnp.mean(xc * xc, axis=-1, keepdims=True)
    inv = jax.lax.rsqrt(var + jnp.float32(eps))          # EUP rsqrt
    return xc * inv * gamma + beta


def _gelu_f32(h, approximate):
    if approximate:
        # tanh form -> transcendental lands in the EUP slot (cheap on v6e/v7x).
        return jax.nn.gelu(h, approximate=True)
    # Exact erf form, matching torch.nn.GELU() default (VALU polynomial).
    return 0.5 * h * (1.0 + jax.lax.erf(h * jnp.float32(1.0 / sqrt(2.0))))


# ----------------------------------------------------------------------------
# Kernel bodies
# ----------------------------------------------------------------------------
def _prenorm_ffn_resident_kernel(x_ref, g_ref, bt_ref, w1_ref, b1_ref, w2_ref,
                                 b2_ref, o_ref, *, eps, approximate_gelu):
    """Weight-resident path: single H chunk, grid = (row_tiles,)."""
    xn = _layer_norm_f32(x_ref[...], g_ref[...], bt_ref[...], eps)
    h = jnp.dot(xn.astype(w1_ref.dtype), w1_ref[...],
                preferred_element_type=jnp.float32) + b1_ref[...]
    h = _gelu_f32(h, approximate_gelu)
    # Dropout(p=0.0) is the identity -> no-op.
    out = jnp.dot(h.astype(w2_ref.dtype), w2_ref[...],
                  preferred_element_type=jnp.float32) + b2_ref[...]
    o_ref[...] = out.astype(o_ref.dtype)


def _prenorm_ffn_chunked_kernel(x_ref, g_ref, bt_ref, w1_ref, b1_ref, w2_ref,
                                b2_ref, o_ref, xn_ref, acc_ref, *,
                                eps, approximate_gelu):
    """Fallback path: hidden dim chunked along a trailing reduction axis."""
    k = pl.program_id(1)
    nk = pl.num_programs(1)

    # LayerNorm once per row tile (first H chunk only).
    @pl.when(k == 0)
    def _():
        xn = _layer_norm_f32(x_ref[...], g_ref[...], bt_ref[...], eps)
        xn_ref[...] = xn.astype(xn_ref.dtype)

    h = jnp.dot(xn_ref[...], w1_ref[...],
                preferred_element_type=jnp.float32) + b1_ref[...]
    h = _gelu_f32(h, approximate_gelu)
    contrib = jnp.dot(h.astype(w2_ref.dtype), w2_ref[...],
                      preferred_element_type=jnp.float32)

    # First chunk overwrites the accumulator (no zero-init + RMW).
    @pl.when(k == 0)
    def _():
        acc_ref[...] = contrib

    @pl.when(k > 0)
    def _():
        acc_ref[...] += contrib

    @pl.when(k == nk - 1)
    def _():
        o_ref[...] = (acc_ref[...] + b2_ref[...]).astype(o_ref.dtype)


# ----------------------------------------------------------------------------
# Tile selection / VMEM budgeting
# ----------------------------------------------------------------------------
_TM_CANDIDATES = (512, 256, 128, 64, 32, 16, 8)
_TH_CANDIDATES = (2048, 1024, 512, 256, 128)


def _vmem_budget_bytes():
    cap = 64 * 1024 * 1024                 # conservative fallback (v7x per-TC)
    try:
        info = pltpu.get_tpu_info()
        cap = int(getattr(info, "vmem_capacity_bytes", cap))
    except Exception:
        pass
    # ~25% headroom for compiler-internal scratch; never below 32 MiB.
    return max(32 * 1024 * 1024, int(cap * 0.75))


def _select_tiles(rows, D, H, cd, od, budget, tile_m, tile_h):
    rows_p8 = _round_up(max(rows, 1), 8)
    H_p128 = _round_up(H, 128)
    # Keep the "parallel" row axis >= 2 steps when possible so v7x's two
    # TensorCores both get work (and the pipeline has something to overlap).
    tm_cap = rows_p8 if rows_p8 <= 8 else min(rows_p8,
                                              _round_up((rows + 1) // 2, 8))

    fixed = 2 * H_p128 * 4 + 6 * D * 4     # b1 chunks + gamma/beta/b2 (f32)

    def bytes_for(tm, th):
        resident = th >= H_p128
        b = (fixed
             + 4 * D * th * cd             # W1 + W2 blocks (double-buffered)
             + 2 * tm * D * cd             # x tiles
             + 2 * tm * D * od             # out tiles
             + tm * th * 4                 # GELU intermediate (f32)
             + 2 * tm * D * 4)             # LayerNorm / matmul f32 temporaries
        if not resident:
            b += tm * D * cd + tm * D * 4  # xn scratch + f32 accumulator
        return b

    if tile_m is not None:
        tile_m = max(8, _round_up(min(tile_m, rows_p8), 8))
    if tile_h is not None:
        tile_h = max(128, _round_up(min(tile_h, H_p128), 128))

    tm_opts = [tile_m] if tile_m is not None else \
        ([t for t in _TM_CANDIDATES if t <= tm_cap] or [8])
    # Prefer weight-resident (single H chunk): weights stay in VMEM across all
    # row tiles and the accumulator RMW / epilogue disappear.
    th_opts = [tile_h] if tile_h is not None else \
        ([H_p128] + [t for t in _TH_CANDIDATES if t < H_p128])

    for th in th_opts:
        for tm in tm_opts:
            if bytes_for(tm, th) <= budget:
                return tm, th
    return tm_opts[-1], th_opts[-1]


# ----------------------------------------------------------------------------
# Wrapper
# ----------------------------------------------------------------------------
def pre_norm_feed_forward(x, gamma, beta, w1, b1, w2, b2, *,
                          eps=1e-5, tile_m=None, tile_h=None,
                          compute_dtype=jnp.bfloat16,   # MXU-native default
                          approximate_gelu=False,
                          weight_buffers=2):
    """PreNorm(dim, FeedForward): x (B,N,D); gamma/beta (D,);
    w1 (D,H); b1 (H,); w2 (H,D); b2 (D,).  Dropout p=0 (eval) is identity."""
    B, N, D = x.shape
    H = w1.shape[1]
    out_dtype = x.dtype
    compute_dtype = jnp.dtype(compute_dtype)
    cd = compute_dtype.itemsize
    od = jnp.dtype(out_dtype).itemsize
    rows = B * N

    budget = _vmem_budget_bytes()
    tile_m, tile_h = _select_tiles(rows, D, H, cd, od, budget, tile_m, tile_h)
    rows_p = _round_up(rows, tile_m)
    H_p = _round_up(H, tile_h)
    single_chunk = (H_p == tile_h)

    # --- wrapper-side layout / dtype plumbing (padding is mathematically inert)
    x2 = x.reshape(rows, D).astype(compute_dtype)
    if rows_p != rows:
        x2 = jnp.pad(x2, ((0, rows_p - rows), (0, 0)))
    w1c = w1.astype(compute_dtype)
    w2c = w2.astype(compute_dtype)
    b1f = b1.astype(jnp.float32)
    if H_p != H:
        w1c = jnp.pad(w1c, ((0, 0), (0, H_p - H)))
        b1f = jnp.pad(b1f, ((0, H_p - H),))
        w2c = jnp.pad(w2c, ((0, H_p - H), (0, 0)))
    g2 = gamma.astype(jnp.float32).reshape(1, D)
    bt2 = beta.astype(jnp.float32).reshape(1, D)
    b1_2 = b1f.reshape(1, H_p)
    b2_2 = b2.astype(jnp.float32).reshape(1, D)

    if single_chunk:
        grid = (rows_p // tile_m,)
        in_specs = [
            pl.BlockSpec((tile_m, D), lambda i: (i, 0)),       # x rows
            pl.BlockSpec((1, D), lambda i: (0, 0)),            # gamma
            pl.BlockSpec((1, D), lambda i: (0, 0)),            # beta
            pl.BlockSpec((D, tile_h), lambda i: (0, 0)),       # W1 (resident)
            pl.BlockSpec((1, tile_h), lambda i: (0, 0)),       # b1
            pl.BlockSpec((tile_h, D), lambda i: (0, 0)),       # W2 (resident)
            pl.BlockSpec((1, D), lambda i: (0, 0)),            # b2
        ]
        out_specs = pl.BlockSpec((tile_m, D), lambda i: (i, 0))
        scratch_shapes = []
        dim_sem = ("parallel",)
        kernel = functools.partial(_prenorm_ffn_resident_kernel, eps=float(eps),
                                   approximate_gelu=approximate_gelu)
    else:
        # Deeper buffering of the weight chunks only if explicitly requested.
        w_kw = {} if weight_buffers == 2 else \
            {"pipeline_mode": pl.Buffered(int(weight_buffers))}
        grid = (rows_p // tile_m, H_p // tile_h)
        in_specs = [
            pl.BlockSpec((tile_m, D), lambda i, k: (i, 0)),          # x rows
            pl.BlockSpec((1, D), lambda i, k: (0, 0)),               # gamma
            pl.BlockSpec((1, D), lambda i, k: (0, 0)),               # beta
            pl.BlockSpec((D, tile_h), lambda i, k: (0, k), **w_kw),  # W1 chunk
            pl.BlockSpec((1, tile_h), lambda i, k: (0, k)),          # b1 chunk
            pl.BlockSpec((tile_h, D), lambda i, k: (k, 0), **w_kw),  # W2 chunk
            pl.BlockSpec((1, D), lambda i, k: (0, 0)),               # b2
        ]
        out_specs = pl.BlockSpec((tile_m, D), lambda i, k: (i, 0))
        scratch_shapes = [
            pltpu.VMEM((tile_m, D), compute_dtype),                  # LayerNorm(x)
            pltpu.VMEM((tile_m, D), jnp.float32),                    # f32 accum
        ]
        dim_sem = ("parallel", "arbitrary")
        kernel = functools.partial(_prenorm_ffn_chunked_kernel, eps=float(eps),
                                   approximate_gelu=approximate_gelu)

    weight_passes = 1 if single_chunk else rows_p // tile_m
    cost = pl.CostEstimate(
        flops=4 * rows * D * H + 10 * rows * D,          # 2 GEMMs + LayerNorm
        transcendentals=(rows * H + rows) if approximate_gelu else rows,
        bytes_accessed=int(x2.size * cd + rows_p * D * od
                           + weight_passes * (w1c.size + w2c.size) * cd
                           + 4 * (b1_2.size + b2_2.size + g2.size + bt2.size)),
    )

    out2 = pl.pallas_call(
        kernel,
        out_shape=jax.ShapeDtypeStruct((rows_p, D), out_dtype),
        grid_spec=pltpu.PrefetchScalarGridSpec(
            num_scalar_prefetch=0,
            grid=grid,
            in_specs=in_specs,
            out_specs=out_specs,
            scratch_shapes=scratch_shapes,
        ),
        compiler_params=pltpu.CompilerParams(
            dimension_semantics=dim_sem,
            vmem_limit_bytes=int(budget)),
        cost_estimate=cost,
    )(x2, g2, bt2, w1c, b1_2, w2c, b2_2)

    return out2[:rows].reshape(B, N, D)


def init_params(key, dim, hidden_dim, dtype=jnp.float32):
    """Deterministic init mimicking torch.nn.Linear default (U[-1/sqrt(fan_in), +])."""
    k1, k2, k3, k4 = jax.random.split(key, 4)
    bound1 = 1.0 / sqrt(dim)
    bound2 = 1.0 / sqrt(hidden_dim)
    w1 = jax.random.uniform(k1, (dim, hidden_dim), dtype, -bound1, bound1)
    b1 = jax.random.uniform(k2, (hidden_dim,), dtype, -bound1, bound1)
    w2 = jax.random.uniform(k3, (hidden_dim, dim), dtype, -bound2, bound2)
    b2 = jax.random.uniform(k4, (dim,), dtype, -bound2, bound2)
    return w1, b1, w2, b2


if __name__ == "__main__":
    key = jax.random.PRNGKey(0)
    kx, kg, kb, kp = jax.random.split(key, 4)

    # Small but lane-dense shapes (D multiple of 128).
    B, N, DIM, HIDDEN = 2, 8, 128, 256
    x = jax.random.normal(kx, (B, N, DIM), jnp.float32)
    gamma = 1.0 + 0.1 * jax.random.normal(kg, (DIM,), jnp.float32)
    beta = 0.1 * jax.random.normal(kb, (DIM,), jnp.float32)
    w1, b1, w2, b2 = init_params(kp, DIM, HIDDEN)

    # Pure-JAX reference: PreNorm(dim, FeedForward) in eval mode (exact erf GELU).
    mu = jnp.mean(x, axis=-1, keepdims=True)
    var = jnp.mean((x - mu) ** 2, axis=-1, keepdims=True)
    xn = (x - mu) / jnp.sqrt(var + 1e-5) * gamma + beta
    h_ref = xn @ w1 + b1
    ref = (0.5 * h_ref * (1.0 + jax.lax.erf(h_ref / jnp.sqrt(2.0)))) @ w2 + b2
    ref_tanh = jax.nn.gelu(xn @ w1 + b1, approximate=True) @ w2 + b2

    # 1) f32 compute, auto tiles -> weight-resident single-chunk path.
    out = pre_norm_feed_forward(x, gamma, beta, w1, b1, w2, b2,
                                compute_dtype=jnp.float32)
    out = jax.block_until_ready(out)
    assert out.shape == (B, N, DIM)
    assert jnp.allclose(out, ref, atol=1e-4, rtol=1e-4), \
        float(jnp.max(jnp.abs(out - ref)))

    # 2) f32 compute, forced multi-chunk reduction path (2 row tiles x 2 H chunks).
    out_mc = pre_norm_feed_forward(x, gamma, beta, w1, b1, w2, b2,
                                   compute_dtype=jnp.float32,
                                   tile_m=8, tile_h=128)
    out_mc = jax.block_until_ready(out_mc)
    assert jnp.allclose(out_mc, ref, atol=1e-4, rtol=1e-4), \
        float(jnp.max(jnp.abs(out_mc - ref)))

    # 3) Default bf16-compute / f32-accumulate MXU path.
    out_bf = pre_norm_feed_forward(x, gamma, beta, w1, b1, w2, b2)
    out_bf = jax.block_until_ready(out_bf)
    assert out_bf.shape == (B, N, DIM)
    assert jnp.allclose(out_bf, ref, atol=5e-2, rtol=5e-2), \
        float(jnp.max(jnp.abs(out_bf - ref)))

    # 4) tanh-GELU fast path (recommended for v6e/v7x) vs. its own reference.
    out_tanh = pre_norm_feed_forward(x, gamma, beta, w1, b1, w2, b2,
                                     compute_dtype=jnp.float32,
                                     approximate_gelu=True)
    out_tanh = jax.block_until_ready(out_tanh)
    assert jnp.allclose(out_tanh, ref_tanh, atol=1e-4, rtol=1e-4), \
        float(jnp.max(jnp.abs(out_tanh - ref_tanh)))

    print("KERNEL_OK")
</pallas_src>

<mosaic_0001>
module attributes {stable_mosaic.version = 11 : i64} {
  func.func @_prenorm_ffn_resident_kernel(%arg0: i32, %arg1: memref<8x128xf32, #tpu.memory_space<vmem>>, %arg2: memref<1x128xf32, #tpu.memory_space<vmem>>, %arg3: memref<1x128xf32, #tpu.memory_space<vmem>>, %arg4: memref<128x256xf32, #tpu.memory_space<vmem>>, %arg5: memref<1x256xf32, #tpu.memory_space<vmem>>, %arg6: memref<256x128xf32, #tpu.memory_space<vmem>>, %arg7: memref<1x128xf32, #tpu.memory_space<vmem>>, %arg8: memref<8x128xf32, #tpu.memory_space<vmem>>) attributes {dimension_semantics = [#tpu.dimension_semantics<parallel>], iteration_bounds = array<i64: 2>, scalar_prefetch = 0 : i64, scratch_operands = 0 : i64, tpu.core_type = #tpu.core_type<tc>, window_params = [{transform_indices = @transform_0, window_bounds = array<i64: 8, 128>}, {pipeline_mode = #tpu.pipeline_mode<synchronous>, transform_indices = @transform_1, window_bounds = array<i64: 1, 128>}, {pipeline_mode = #tpu.pipeline_mode<synchronous>, transform_indices = @transform_2, window_bounds = array<i64: 1, 128>}, {pipeline_mode = #tpu.pipeline_mode<synchronous>, transform_indices = @transform_3, window_bounds = array<i64: 128, 256>}, {pipeline_mode = #tpu.pipeline_mode<synchronous>, transform_indices = @transform_4, window_bounds = array<i64: 1, 256>}, {pipeline_mode = #tpu.pipeline_mode<synchronous>, transform_indices = @transform_5, window_bounds = array<i64: 256, 128>}, {pipeline_mode = #tpu.pipeline_mode<synchronous>, transform_indices = @transform_6, window_bounds = array<i64: 1, 128>}, {transform_indices = @transform_7, window_bounds = array<i64: 8, 128>}]} {
    %c0 = arith.constant 0 : index
    %c0_0 = arith.constant 0 : index
    %0 = vector.load %arg1[%c0, %c0_0] : memref<8x128xf32, #tpu.memory_space<vmem>>, vector<8x128xf32>
    %c0_1 = arith.constant 0 : index
    %c0_2 = arith.constant 0 : index
    %1 = vector.load %arg2[%c0_1, %c0_2] : memref<1x128xf32, #tpu.memory_space<vmem>>, vector<1x128xf32>
    %c0_3 = arith.constant 0 : index
    %c0_4 = arith.constant 0 : index
    %2 = vector.load %arg3[%c0_3, %c0_4] : memref<1x128xf32, #tpu.memory_space<vmem>>, vector<1x128xf32>
    %cst = arith.constant dense<0.000000e+00> : vector<8xf32>
    %3 = vector.multi_reduction <add>, %0, %cst [1] : vector<8x128xf32> to vector<8xf32>
    %4 = vector.shape_cast %3 : vector<8xf32> to vector<8x1xf32>
    %cst_5 = arith.constant 1.280000e+02 : f32
    %5 = vector.broadcast %cst_5 : f32 to vector<8x1xf32>
    %6 = arith.divf %4, %5 : vector<8x1xf32>
    %7 = vector.broadcast %6 : vector<8x1xf32> to vector<8x128xf32>
    %8 = arith.subf %0, %7 : vector<8x128xf32>
    %9 = arith.mulf %8, %8 : vector<8x128xf32>
    %cst_6 = arith.constant dense<0.000000e+00> : vector<8xf32>
    %10 = vector.multi_reduction <add>, %9, %cst_6 [1] : vector<8x128xf32> to vector<8xf32>
    %11 = vector.shape_cast %10 : vector<8xf32> to vector<8x1xf32>
    %cst_7 = arith.constant 1.280000e+02 : f32
    %12 = vector.broadcast %cst_7 : f32 to vector<8x1xf32>
    %13 = arith.divf %11, %12 : vector<8x1xf32>
    %cst_8 = arith.constant 9.99999974E-6 : f32
    %14 = vector.broadcast %cst_8 : f32 to vector<8x1xf32>
    %15 = arith.addf %13, %14 : vector<8x1xf32>
    %16 = math.rsqrt %15 : vector<8x1xf32>
    %17 = vector.broadcast %16 : vector<8x1xf32> to vector<8x128xf32>
    %18 = arith.mulf %8, %17 : vector<8x128xf32>
    %19 = vector.broadcast %1 : vector<1x128xf32> to vector<8x128xf32>
    %20 = arith.mulf %18, %19 : vector<8x128xf32>
    %21 = vector.broadcast %2 : vector<1x128xf32> to vector<8x128xf32>
    %22 = arith.addf %20, %21 : vector<8x128xf32>
    %c0_9 = arith.constant 0 : index
    %c0_10 = arith.constant 0 : index
    %23 = vector.load %arg4[%c0_9, %c0_10] : memref<128x256xf32, #tpu.memory_space<vmem>>, vector<128x256xf32>
    %cst_11 = arith.constant dense<0.000000e+00> : vector<8x256xf32>
    %24 = tpu.matmul %22, %23, %cst_11 {dimension_numbers = #tpu.dot_dimension_numbers<[1], [0], [0], [1], [0, 0, 1, 1], [], []>} : vector<8x128xf32>, vector<128x256xf32>, vector<8x256xf32> -> vector<8x256xf32>
    %c0_12 = arith.constant 0 : index
    %c0_13 = arith.constant 0 : index
    %25 = vector.load %arg5[%c0_12, %c0_13] : memref<1x256xf32, #tpu.memory_space<vmem>>, vector<1x256xf32>
    %26 = vector.broadcast %25 : vector<1x256xf32> to vector<8x256xf32>
    %27 = arith.addf %24, %26 : vector<8x256xf32>
    %cst_14 = arith.constant 5.000000e-01 : f32
    %28 = vector.broadcast %cst_14 : f32 to vector<8x256xf32>
    %29 = arith.mulf %28, %27 : vector<8x256xf32>
    %cst_15 = arith.constant 0.707106769 : f32
    %30 = vector.broadcast %cst_15 : f32 to vector<8x256xf32>
    %31 = arith.mulf %27, %30 : vector<8x256xf32>
    %32 = math.erf %31 : vector<8x256xf32>
    %cst_16 = arith.constant 1.000000e+00 : f32
    %33 = vector.broadcast %cst_16 : f32 to vector<8x256xf32>
    %34 = arith.addf %33, %32 : vector<8x256xf32>
    %35 = arith.mulf %29, %34 : vector<8x256xf32>
    %c0_17 = arith.constant 0 : index
    %c0_18 = arith.constant 0 : index
    %36 = vector.load %arg6[%c0_17, %c0_18] : memref<256x128xf32, #tpu.memory_space<vmem>>, vector<256x128xf32>
    %cst_19 = arith.constant dense<0.000000e+00> : vector<8x128xf32>
    %37 = tpu.matmul %35, %36, %cst_19 {dimension_numbers = #tpu.dot_dimension_numbers<[1], [0], [0], [1], [0, 0, 1, 1], [], []>} : vector<8x256xf32>, vector<256x128xf32>, vector<8x128xf32> -> vector<8x128xf32>
    %c0_20 = arith.constant 0 : index
    %c0_21 = arith.constant 0 : index
    %38 = vector.load %arg7[%c0_20, %c0_21] : memref<1x128xf32, #tpu.memory_space<vmem>>, vector<1x128xf32>
    %39 = vector.broadcast %38 : vector<1x128xf32> to vector<8x128xf32>
    %40 = arith.addf %37, %39 : vector<8x128xf32>
    %c0_22 = arith.constant 0 : index
    %c0_23 = arith.constant 0 : index
    %41 = vector.load %arg8[%c0_22, %c0_23] : memref<8x128xf32, #tpu.memory_space<vmem>>, vector<8x128xf32>
    tpu.vector_store %arg8[%c0_22, %c0_23], %40 {strides = array<i32>} : memref<8x128xf32, #tpu.memory_space<vmem>>, vector<8x128xf32>,
    return
  }
  func.func @transform_0(%arg0: i32) -> (i32, i32) {
    %c0_i32 = arith.constant 0 : i32
    %c0_i32_0 = arith.constant 0 : i32
    return %arg0, %c0_i32 : i32, i32
  }
  func.func @transform_1(%arg0: i32) -> (i32, i32) {
    %c0_i32 = arith.constant 0 : i32
    %c0_i32_0 = arith.constant 0 : i32
    %c0_i32_1 = arith.constant 0 : i32
    return %c0_i32, %c0_i32_0 : i32, i32
  }
  func.func @transform_2(%arg0: i32) -> (i32, i32) {
    %c0_i32 = arith.constant 0 : i32
    %c0_i32_0 = arith.constant 0 : i32
    %c0_i32_1 = arith.constant 0 : i32
    return %c0_i32, %c0_i32_0 : i32, i32
  }
  func.func @transform_3(%arg0: i32) -> (i32, i32) {
    %c0_i32 = arith.constant 0 : i32
    %c0_i32_0 = arith.constant 0 : i32
    %c0_i32_1 = arith.constant 0 : i32
    return %c0_i32, %c0_i32_0 : i32, i32
  }
  func.func @transform_4(%arg0: i32) -> (i32, i32) {
    %c0_i32 = arith.constant 0 : i32
    %c0_i32_0 = arith.constant 0 : i32
    %c0_i32_1 = arith.constant 0 : i32
    return %c0_i32, %c0_i32_0 : i32, i32
  }
  func.func @transform_5(%arg0: i32) -> (i32, i32) {
    %c0_i32 = arith.constant 0 : i32
    %c0_i32_0 = arith.constant 0 : i32
    %c0_i32_1 = arith.constant 0 : i32
    return %c0_i32, %c0_i32_0 : i32, i32
  }
  func.func @transform_6(%arg0: i32) -> (i32, i32) {
    %c0_i32 = arith.constant 0 : i32
    %c0_i32_0 = arith.constant 0 : i32
    %c0_i32_1 = arith.constant 0 : i32
    return %c0_i32, %c0_i32_0 : i32, i32
  }
  func.func @transform_7(%arg0: i32) -> (i32, i32) {
    %c0_i32 = arith.constant 0 : i32
    %c0_i32_0 = arith.constant 0 : i32
    return %arg0, %c0_i32 : i32, i32
  }
}

</mosaic_0001>

<llo_original>
// kernel: tpu_custom_call.1
$region0: #{tpu_custom_call.1}
  #allocation0 [shape = 'u32[]', space=smem, size = 0x4, offset = 0x4, fixed_abs, tag = 'smem constant byte address 0x4 - core index']
  #allocation1 [shape = 'u32[72,128]{1,0:T(1,128)}', space=vmem, size = 0x9000, scoped, tag = 'internal scratch']
  %s0 = inlined_call_operand.hbm [shape: f32[16,128], index: 0, kind: input, shape index: {}]
  %s1 = inlined_call_operand.hbm [shape: f32[1,128], index: 1, kind: input, shape index: {}]
  %s2 = inlined_call_operand.vmem [shape: f32[1,128], index: 2, kind: input, shape index: {}]
  %s3 = inlined_call_operand.hbm [shape: f32[128,256], index: 3, kind: input, shape index: {}]
  %s4 = inlined_call_operand.vmem [shape: f32[1,256], index: 4, kind: input, shape index: {}]
  %s5 = inlined_call_operand.hbm [shape: f32[256,128], index: 5, kind: input, shape index: {}]
  %s6 = inlined_call_operand.vmem [shape: f32[1,128], index: 6, kind: input, shape index: {}]
  %s7 = inlined_call_operand.hbm [shape: f32[16,128], index: 7, kind: output, shape index: {}]
  %s8 = sld [smem:[#allocation0]]
  $region77: #{tpu_custom_call.1} parent=0
    _
  %s10 = ssub.s32 1, %s8
  %s11 = scalar_select 0, %s10, %s8
  $region1: #{tpu_custom_call.1} parent=0
    #allocation2 [shape = 'u8[8192]{0}', space=vmem, size = 0x2000, scoped, tag = 'input window, operand 0']
    #allocation3 [shape = 's32[2]{0}', space=sflag, size = 0x8, scoped, tag = 'scoped memory for tpu_custom_call.1']
    #allocation4 [shape = 's32[2]{0}', space=sflag, size = 0x8, scoped, tag = 'scoped memory for tpu_custom_call.1']
    #allocation5 [shape = 'u8[512]{0}', space=vmem, size = 0x400, scoped, tag = 'input window, operand 1, single buffered']
    #allocation6 [shape = 's32[1]{0}', space=sflag, size = 0x4, scoped, tag = 'scoped memory for tpu_custom_call.1']
    #allocation7 [shape = 'u8[131072]{0}', space=vmem, size = 0x20000, scoped, tag = 'input window, operand 3, single buffered']
    #allocation8 [shape = 'u8[131072]{0}', space=vmem, size = 0x20000, scoped, tag = 'input window, operand 5, single buffered']
    #allocation9 [shape = 's32[1]{0}', space=sflag, size = 0x4, scoped, tag = 'scoped memory for tpu_custom_call.1']
    #allocation10 [shape = 'u8[8192]{0}', space=vmem, size = 0x2000, scoped, tag = 'output window, operand 0']
    %12 = vsyncpa [#allocation3], 0
    %s13 = scalar_lea.sflag [#allocation3], 1
    %14 = vsyncpa %s13, 0
    %15 = vsyncpa [#allocation6], 0
    %16 = vsyncpa [#allocation9], 0
    %17 = vsyncpa [#allocation4], 0
    %s18 = scalar_lea.sflag [#allocation4], 1
    %19 = vsyncpa %s18, 0
    loop: start=0, step=1, limit=4
    $region2: #{tpu_custom_call.1} parent=1 // loop_pre_header
      _
    $region3: #{tpu_custom_call.1} parent=1 // loop_header
      %s21 = sphi 0, %s25
      %p22 = scmp.ge.s32.totalorder %s21, 4
      %s31 = sphi 0, %s33
      %s34 = sphi 0, %s31
      %s35 = sphi 0, %s34
      %s51 = sphi 0, %s35
      %s55 = sphi 0, %s55
      %s57 = sphi 0, %s55
      %s58 = sphi 0, %s57
      %s72 = sphi 0, %s58
      %s76 = sphi 0, %s76
      %s78 = sphi 0, %s76
      %s79 = sphi 0, %s78
      %s93 = sphi 0, %s79
      %s97 = sphi 0, %s97
      %s99 = sphi 0, %s97
      %s100 = sphi 0, %s99
      %s114 = sphi 0, %s100
      %s118 = sphi 0, %s118
      %s120 = sphi 0, %s118
      %s121 = sphi 0, %s120
      %s135 = sphi 0, %s121
      %s139 = sphi 0, %s139
      %s141 = sphi 0, %s139
      %s142 = sphi 0, %s141
      %s156 = sphi 0, %s142
      %s160 = sphi 0, %s160
      %s162 = sphi 0, %s160
      %s163 = sphi 0, %s162
      %s177 = sphi 0, %s163
      %s183 = sphi 0, %s185
      %s186 = sphi 0, %s183
      %s187 = sphi 0, %s186
      %s203 = sphi 0, %s187
    $region4: #{tpu_custom_call.1} parent=1 // loop_header_branch
      %24 = sbr.rel (%p22) target = $region8
    $region5: #{tpu_custom_call.1} parent=1 // loop_body
      %s26 = ssub.s32 %s21, 1
      %s27 = ssub.s32 %s21, 2
      %s28 = sadd.s32 %s21, 1
      %s29 = ssub.s32 %s21, %s28
      %p30 = scmp.eq.s32.totalorder %s29, 0
      %s32 = sadd.s32 %s31, 1
      %s33 = scalar_select %p30, %s31, %s32
      %p36 = pneg %p30
      %p37 = scmp.eq.s32.totalorder %s21, 1
      %p38 = por %p36, %p37
      %p39 = scmp.ne.s32.totalorder %s31, %s34
      %p40 = scmp.eq.s32.totalorder %s21, 0
      %p41 = por %p39, %p40
      %p42 = scmp.ne.s32.totalorder %s31, %s34
      %p43 = scmp.eq.s32.totalorder %s26, 1
      %p44 = por %p42, %p43
      %p45 = scmp.ne.s32.totalorder %s34, %s35
      %p46 = scmp.eq.s32.totalorder %s26, 0
      %p47 = por %p45, %p46
      %p48 = scmp.ne.s32.totalorder %s34, %s35
      %p49 = scmp.eq.s32.totalorder %s27, 1
      %p50 = por %p48, %p49
      %p52 = scmp.ne.s32.totalorder %s35, %s51
      %p53 = scmp.eq.s32.totalorder %s27, 0
      %p54 = por %p52, %p53
      %s56 = sadd.s32 %s55, 1
      %p59 = scmp.eq.s32.totalorder %s21, 1
      %p60 = scmp.ne.s32.totalorder %s55, %s57
      %p61 = scmp.eq.s32.totalorder %s21, 0
      %p62 = por %p60, %p61
      %p63 = scmp.ne.s32.totalorder %s55, %s57
      %p64 = scmp.eq.s32.totalorder %s26, 1
      %p65 = por %p63, %p64
      %p66 = scmp.ne.s32.totalorder %s57, %s58
      %p67 = scmp.eq.s32.totalorder %s26, 0
      %p68 = por %p66, %p67
      %p69 = scmp.ne.s32.totalorder %s57, %s58
      %p70 = scmp.eq.s32.totalorder %s27, 1
      %p71 = por %p69, %p70
      %p73 = scmp.ne.s32.totalorder %s58, %s72
      %p74 = scmp.eq.s32.totalorder %s27, 0
      %p75 = por %p73, %p74
      %s77 = sadd.s32 %s76, 1
      %p80 = scmp.eq.s32.totalorder %s21, 1
      %p81 = scmp.ne.s32.totalorder %s76, %s78
      %p82 = scmp.eq.s32.totalorder %s21, 0
      %p83 = por %p81, %p82
      %p84 = scmp.ne.s32.totalorder %s76, %s78
      %p85 = scmp.eq.s32.totalorder %s26, 1
      %p86 = por %p84, %p85
      %p87 = scmp.ne.s32.totalorder %s78, %s79
      %p88 = scmp.eq.s32.totalorder %s26, 0
      %p89 = por %p87, %p88
      %p90 = scmp.ne.s32.totalorder %s78, %s79
      %p91 = scmp.eq.s32.totalorder %s27, 1
      %p92 = por %p90, %p91
      %p94 = scmp.ne.s32.totalorder %s79, %s93
      %p95 = scmp.eq.s32.totalorder %s27, 0
      %p96 = por %p94, %p95
      %s98 = sadd.s32 %s97, 1
      %p101 = scmp.eq.s32.totalorder %s21, 1
      %p102 = scmp.ne.s32.totalorder %s97, %s99
      %p103 = scmp.eq.s32.totalorder %s21, 0
      %p104 = por %p102, %p103
      %p105 = scmp.ne.s32.totalorder %s97, %s99
      %p106 = scmp.eq.s32.totalorder %s26, 1
      %p107 = por %p105, %p106
      %p108 = scmp.ne.s32.totalorder %s99, %s100
      %p109 = scmp.eq.s32.totalorder %s26, 0
      %p110 = por %p108, %p109
      %p111 = scmp.ne.s32.totalorder %s99, %s100
      %p112 = scmp.eq.s32.totalorder %s27, 1
      %p113 = por %p111, %p112
      %p115 = scmp.ne.s32.totalorder %s100, %s114
      %p116 = scmp.eq.s32.totalorder %s27, 0
      %p117 = por %p115, %p116
      %s119 = sadd.s32 %s118, 1
      %p122 = scmp.eq.s32.totalorder %s21, 1
      %p123 = scmp.ne.s32.totalorder %s118, %s120
      %p124 = scmp.eq.s32.totalorder %s21, 0
      %p125 = por %p123, %p124
      %p126 = scmp.ne.s32.totalorder %s118, %s120
      %p127 = scmp.eq.s32.totalorder %s26, 1
      %p128 = por %p126, %p127
      %p129 = scmp.ne.s32.totalorder %s120, %s121
      %p130 = scmp.eq.s32.totalorder %s26, 0
      %p131 = por %p129, %p130
      %p132 = scmp.ne.s32.totalorder %s120, %s121
      %p133 = scmp.eq.s32.totalorder %s27, 1
      %p134 = por %p132, %p133
      %p136 = scmp.ne.s32.totalorder %s121, %s135
      %p137 = scmp.eq.s32.totalorder %s27, 0
      %p138 = por %p136, %p137
      %s140 = sadd.s32 %s139, 1
      %p143 = scmp.eq.s32.totalorder %s21, 1
      %p144 = scmp.ne.s32.totalorder %s139, %s141
      %p145 = scmp.eq.s32.totalorder %s21, 0
      %p146 = por %p144, %p145
      %p147 = scmp.ne.s32.totalorder %s139, %s141
      %p148 = scmp.eq.s32.totalorder %s26, 1
      %p149 = por %p147, %p148
      %p150 = scmp.ne.s32.totalorder %s141, %s142
      %p151 = scmp.eq.s32.totalorder %s26, 0
      %p152 = por %p150, %p151
      %p153 = scmp.ne.s32.totalorder %s141, %s142
      %p154 = scmp.eq.s32.totalorder %s27, 1
      %p155 = por %p153, %p154
      %p157 = scmp.ne.s32.totalorder %s142, %s156
      %p158 = scmp.eq.s32.totalorder %s27, 0
      %p159 = por %p157, %p158
      %s161 = sadd.s32 %s160, 1
      %p164 = scmp.eq.s32.totalorder %s21, 1
      %p165 = scmp.ne.s32.totalorder %s160, %s162
      %p166 = scmp.eq.s32.totalorder %s21, 0
      %p167 = por %p165, %p166
      %p168 = scmp.ne.s32.totalorder %s160, %s162
      %p169 = scmp.eq.s32.totalorder %s26, 1
      %p170 = por %p168, %p169
      %p171 = scmp.ne.s32.totalorder %s162, %s163
      %p172 = scmp.eq.s32.totalorder %s26, 0
      %p173 = por %p171, %p172
      %p174 = scmp.ne.s32.totalorder %s162, %s163
      %p175 = scmp.eq.s32.totalorder %s27, 1
      %p176 = por %p174, %p175
      %p178 = scmp.ne.s32.totalorder %s163, %s177
      %p179 = scmp.eq.s32.totalorder %s27, 0
      %p180 = por %p178, %p179
      %s181 = ssub.s32 %s21, %s28
      %p182 = scmp.eq.s32.totalorder %s181, 0
      %s184 = sadd.s32 %s183, 1
      %s185 = scalar_select %p182, %s183, %s184
      %p188 = pneg %p182
      %p189 = scmp.eq.s32.totalorder %s21, 1
      %p190 = por %p188, %p189
      %p191 = scmp.ne.s32.totalorder %s183, %s186
      %p192 = scmp.eq.s32.totalorder %s21, 0
      %p193 = por %p191, %p192
      %p194 = scmp.ne.s32.totalorder %s183, %s186
      %p195 = scmp.eq.s32.totalorder %s26, 1
      %p196 = por %p194, %p195
      %p197 = scmp.ne.s32.totalorder %s186, %s187
      %p198 = scmp.eq.s32.totalorder %s26, 0
      %p199 = por %p197, %p198
      %p200 = scmp.ne.s32.totalorder %s186, %s187
      %p201 = scmp.eq.s32.totalorder %s27, 1
      %p202 = por %p200, %p201
      %p204 = scmp.ne.s32.totalorder %s187, %s203
      %p205 = scmp.eq.s32.totalorder %s27, 0
      %p206 = por %p204, %p205
      %p207 = scmp.le.s32.totalorder 1, %s21
      %p208 = scmp.lt.s32.totalorder %s21, 3
      %p209 = pnand %p207, %p208
      %p210 = pneg %p209
      // Predicated region
      $region9: #{tpu_custom_call.1} parent=5 // pred_check
        _
      $region10: #{tpu_custom_call.1} parent=5 // pred_check_branch
        %212 = sbr.rel (%p209) target = $region12
      $region11: #{tpu_custom_call.1} parent=5 // pred_region
        %s213 = ssub.s32 %s21, 1
        // Predicated region
        $region13: #{tpu_custom_call.1} parent=11 // pred_check
          %p214 = pneg %p68
        $region14: #{tpu_custom_call.1} parent=11 // pred_check_branch
          %216 = sbr.rel (%p214) target = $region16
        $region15: #{tpu_custom_call.1} parent=11 // pred_region
          %218 = vsyncadd [#allocation6], 0
          %s220 = sshll.u32 %s1, 4
          %s221 = int_to_ptr.hbm [resolvable:$true] %s220
          %s222 = sshll.u32 [#allocation5], 4
          %s223 = int_to_ptr.vmem [resolvable:$true] %s222
          %225 = dma.hbm_to_vmem [thread:$0]  %s221, 16, %s223, [#allocation6]
        $region16: #{tpu_custom_call.1} parent=11 // pred_fallthru
          _
        // Predicated region
        $region17: #{tpu_custom_call.1} parent=11 // pred_check
          %p226 = pneg %p89
        $region18: #{tpu_custom_call.1} parent=11 // pred_check_branch
          %228 = sbr.rel (%p226) target = $region20
        $region19: #{tpu_custom_call.1} parent=11 // pred_region
          _
        $region20: #{tpu_custom_call.1} parent=11 // pred_fallthru
          _
        // Predicated region
        $region21: #{tpu_custom_call.1} parent=11 // pred_check
          %p229 = pneg %p110
        $region22: #{tpu_custom_call.1} parent=11 // pred_check_branch
          %231 = sbr.rel (%p229) target = $region24
        $region23: #{tpu_custom_call.1} parent=11 // pred_region
          %233 = vsyncadd [#allocation6], 0
          %s234 = sshll.u32 %s3, 4
          %s235 = int_to_ptr.hbm [resolvable:$true] %s234
          %s236 = sshll.u32 [#allocation7], 4
          %s237 = int_to_ptr.vmem [resolvable:$true] %s236
          %242 = dma.hbm_to_vmem [thread:$0]  %s235, 4096, %s237, [#allocation6], 256, 256, 16
        $region24: #{tpu_custom_call.1} parent=11 // pred_fallthru
          _
        // Predicated region
        $region25: #{tpu_custom_call.1} parent=11 // pred_check
          %p243 = pneg %p131
        $region26: #{tpu_custom_call.1} parent=11 // pred_check_branch
          %245 = sbr.rel (%p243) target = $region28
        $region27: #{tpu_custom_call.1} parent=11 // pred_region
          _
        $region28: #{tpu_custom_call.1} parent=11 // pred_fallthru
          _
        // Predicated region
        $region29: #{tpu_custom_call.1} parent=11 // pred_check
          %p246 = pneg %p152
        $region30: #{tpu_custom_call.1} parent=11 // pred_check_branch
          %248 = sbr.rel (%p246) target = $region32
        $region31: #{tpu_custom_call.1} parent=11 // pred_region
          %250 = vsyncadd [#allocation9], 0
          %s251 = sshll.u32 %s5, 4
          %s252 = int_to_ptr.hbm [resolvable:$true] %s251
          %s253 = sshll.u32 [#allocation8], 4
          %s254 = int_to_ptr.vmem [resolvable:$true] %s253
          %259 = dma.hbm_to_vmem [thread:$0]  %s252, 4096, %s254, [#allocation9], 128, 128, 8
        $region32: #{tpu_custom_call.1} parent=11 // pred_fallthru
          _
        // Predicated region
        $region33: #{tpu_custom_call.1} parent=11 // pred_check
          %p260 = pneg %p173
        $region34: #{tpu_custom_call.1} parent=11 // pred_check_branch
          %262 = sbr.rel (%p260) target = $region36
        $region35: #{tpu_custom_call.1} parent=11 // pred_region
          _
        $region36: #{tpu_custom_call.1} parent=11 // pred_fallthru
          _
      $region12: #{tpu_custom_call.1} parent=5 // pred_fallthru
        _
      %p263 = scmp.lt.s32.totalorder %s21, 2
      // Predicated region
      $region37: #{tpu_custom_call.1} parent=5 // pred_check
        %p264 = pneg %p263
      $region38: #{tpu_custom_call.1} parent=5 // pred_check_branch
        %266 = sbr.rel (%p264) target = $region40
      $region39: #{tpu_custom_call.1} parent=5 // pred_region
        // Predicated region
        $region41: #{tpu_custom_call.1} parent=39 // pred_check
          %p267 = pneg %p41
        $region42: #{tpu_custom_call.1} parent=39 // pred_check_branch
          %269 = sbr.rel (%p267) target = $region44
        $region43: #{tpu_custom_call.1} parent=39 // pred_region
          %s270 = sand.u32 %s31, 1
          %s271 = scalar_lea.sflag [#allocation3], %s270
          %s272 = sand.u32 %s31, 1
          %s273 = smul.addr %s272, 8
          %s274 = scalar_lea.vmem [#allocation2], %s273
          %276 = vsyncadd %s271, 0
          %s277 = smul.addr %s21, 8
          %s278 = scalar_lea.hbm %s0, %s277
          %s280 = sshll.u32 %s278, 4
          %s281 = int_to_ptr.hbm [resolvable:$true] %s280
          %s282 = sshll.u32 %s274, 4
          %s283 = int_to_ptr.vmem [resolvable:$true] %s282
          %285 = dma.hbm_to_vmem [thread:$0]  %s281, 128, %s283, %s271
        $region44: #{tpu_custom_call.1} parent=39 // pred_fallthru
          _
      $region40: #{tpu_custom_call.1} parent=5 // pred_fallthru
        _
      %p286 = scmp.le.s32.totalorder 1, %s21
      %p287 = scmp.lt.s32.totalorder %s21, 3
      %p288 = pnand %p286, %p287
      %p289 = pneg %p288
      // Predicated region
      $region45: #{tpu_custom_call.1} parent=5 // pred_check
        _
      $region46: #{tpu_custom_call.1} parent=5 // pred_check_branch
        %291 = sbr.rel (%p288) target = $region48
      $region47: #{tpu_custom_call.1} parent=5 // pred_region
        %s292 = ssub.s32 %s21, 1
        %s293 = sand.u32 %s34, 1
        %s294 = scalar_lea.sflag [#allocation3], %s293
        %s295 = sand.u32 %s34, 1
        %s296 = smul.addr %s295, 8
        %s297 = scalar_lea.vmem [#allocation2], %s296
        // Predicated region
        $region49: #{tpu_custom_call.1} parent=47 // pred_check
          %p298 = pneg %p47
        $region50: #{tpu_custom_call.1} parent=47 // pred_check_branch
          %300 = sbr.rel (%p298) target = $region52
        $region51: #{tpu_custom_call.1} parent=47 // pred_region
          %302 = dma.done %s294, 128
        $region52: #{tpu_custom_call.1} parent=47 // pred_fallthru
          _
        // Predicated region
        $region53: #{tpu_custom_call.1} parent=47 // pred_check
          %p303 = pneg %p68
        $region54: #{tpu_custom_call.1} parent=47 // pred_check_branch
          %305 = sbr.rel (%p303) target = $region56
        $region55: #{tpu_custom_call.1} parent=47 // pred_region
          %307 = dma.done [#allocation6], 16
        $region56: #{tpu_custom_call.1} parent=47 // pred_fallthru
          _
        // Predicated region
        $region57: #{tpu_custom_call.1} parent=47 // pred_check
          %p308 = pneg %p110
        $region58: #{tpu_custom_call.1} parent=47 // pred_check_branch
          %310 = sbr.rel (%p308) target = $region60
        $region59: #{tpu_custom_call.1} parent=47 // pred_region
          %312 = dma.done [#allocation6], 4096
        $region60: #{tpu_custom_call.1} parent=47 // pred_fallthru
          _
        // Predicated region
        $region61: #{tpu_custom_call.1} parent=47 // pred_check
          %p313 = pneg %p152
        $region62: #{tpu_custom_call.1} parent=47 // pred_check_branch
          %315 = sbr.rel (%p313) target = $region64
        $region63: #{tpu_custom_call.1} parent=47 // pred_region
          %317 = dma.done [#allocation9], 4096
        $region64: #{tpu_custom_call.1} parent=47 // pred_fallthru
          _
        %s318 = sand.u32 %s34, 1
        %s319 = scalar_lea.sflag [#allocation3], %s318
        %s320 = sand.u32 %s34, 1
        %s321 = smul.addr %s320, 8
        %s322 = scalar_lea.vmem [#allocation2], %s321
        %p323 = pneg %p47
        %p324 = pneg %p44
        %p325 = pneg %p68
        %p326 = pneg %p65
        %p327 = pneg %p89
        %p328 = pneg %p86
        %p329 = pneg %p110
        %p330 = pneg %p107
        %p331 = pneg %p131
        %p332 = pneg %p128
        %p333 = pneg %p152
        %p334 = pneg %p149
        %p335 = pneg %p173
        %p336 = pneg %p170
        %p337 = pneg %p199
        %p338 = pneg %p196
        %s339 = sand.u32 %s186, 1
        %s340 = scalar_lea.sflag [#allocation4], %s339
        %s341 = sand.u32 %s186, 1
        %s342 = smul.addr %s341, 8
        %s343 = scalar_lea.vmem [#allocation10], %s342
        %v344 = vld [vmem:[%s297] sm:$0xff]
        %v345 = vld [vmem:[#allocation5] sm:$0x1]
        %v346 = vld [vmem:[%s2] sm:$0x1]
        %347 = vadd.xlane.f32.xlu0 %v344
        %v348 = vpop.xlane.xlu0 %347
        %v349 = vrcp.pop 128.0
        %v350 = vmul.f32 128.0, %v349
        %v351 = vsub.f32 1.0, %v350
        %v352 = vmul.f32 %v349, %v351
        %v353 = vadd.f32 %v349, %v352
        %vm354 = vweird.f32 %v349
        %v355 = vsel %vm354, %v349, %v353
        %v356 = vmul.f32 %v348, %v355
        %v357 = vsub.f32 %v344, %v356
        %v358 = vmul.f32 %v357, %v357
        %359 = vadd.xlane.f32.xlu0 %v358
        %v360 = vpop.xlane.xlu0 %359
        %v361 = vmul.f32 %v360, %v355
        %v362 = vadd.f32 %v361, 1e-05
        %v363 = vrsqrt.pop %v362
        %v364 = vmul.f32 %v363, %v362
        %v365 = vmul.f32 %v364, %v363
        %v366 = vmul.f32 0.5, %v365
        %v367 = vsub.f32 1.5, %v366
        %v368 = vmul.f32 %v363, %v367
        %vm369 = vweird.f32 %v362
        %vm370 = vweird.f32 %v363
        %vm371 = vmor %vm369, %vm370
        %v372 = vsel %vm371, %v363, %v368
        %v373 = vmul.f32 %v357, %v372
        %v375 = vperm.slane %v345, 0
        %v377 = vmul.f32 %v373, %v375
        %v379 = vperm.slane %v346, 0
        %v381 = vadd.f32 %v377, %v379
        %v382 = vld [vmem:[#allocation7] sm:$0xff]
        %v383 = vld [vmem:[#allocation7 + $0x8] sm:$0xff]
        %v384 = vld [vmem:[#allocation7 + $0x10] sm:$0xff]
        %v385 = vld [vmem:[#allocation7 + $0x18] sm:$0xff]
        %v386 = vld [vmem:[#allocation7 + $0x20] sm:$0xff]
        %v387 = vld [vmem:[#allocation7 + $0x28] sm:$0xff]
        %v388 = vld [vmem:[#allocation7 + $0x30] sm:$0xff]
        %v389 = vld [vmem:[#allocation7 + $0x38] sm:$0xff]
        %v390 = vld [vmem:[#allocation7 + $0x40] sm:$0xff]
        %v391 = vld [vmem:[#allocation7 + $0x48] sm:$0xff]
        %v392 = vld [vmem:[#allocation7 + $0x50] sm:$0xff]
        %v393 = vld [vmem:[#allocation7 + $0x58] sm:$0xff]
        %v394 = vld [vmem:[#allocation7 + $0x60] sm:$0xff]
        %v395 = vld [vmem:[#allocation7 + $0x68] sm:$0xff]
        %v396 = vld [vmem:[#allocation7 + $0x70] sm:$0xff]
        %v397 = vld [vmem:[#allocation7 + $0x78] sm:$0xff]
        %v398 = vld [vmem:[#allocation7 + $0x80] sm:$0xff]
        %v399 = vld [vmem:[#allocation7 + $0x88] sm:$0xff]
        %v400 = vld [vmem:[#allocation7 + $0x90] sm:$0xff]
        %v401 = vld [vmem:[#allocation7 + $0x98] sm:$0xff]
        %v402 = vld [vmem:[#allocation7 + $0xa0] sm:$0xff]
        %v403 = vld [vmem:[#allocation7 + $0xa8] sm:$0xff]
        %v404 = vld [vmem:[#allocation7 + $0xb0] sm:$0xff]
        %v405 = vld [vmem:[#allocation7 + $0xb8] sm:$0xff]
        %v406 = vld [vmem:[#allocation7 + $0xc0] sm:$0xff]
        %v407 = vld [vmem:[#allocation7 + $0xc8] sm:$0xff]
        %v408 = vld [vmem:[#allocation7 + $0xd0] sm:$0xff]
        %v409 = vld [vmem:[#allocation7 + $0xd8] sm:$0xff]
        %v410 = vld [vmem:[#allocation7 + $0xe0] sm:$0xff]
        %v411 = vld [vmem:[#allocation7 + $0xe8] sm:$0xff]
        %v412 = vld [vmem:[#allocation7 + $0xf0] sm:$0xff]
        %v413 = vld [vmem:[#allocation7 + $0xf8] sm:$0xff]
        %v414 = vld [vmem:[%s4] sm:$0x3]
        %v416 = vperm.slane %v414, 0
        %v417 = vperm.slane %v414, 1
        %420 = vmatpush.msra.mxu0 %v412
        %421 = vmatpush.msra.mxu0 %v410
        %422 = vmatpush.msra.mxu0 %v408
        %423 = vmatpush.msra.mxu0 %v406
        %424 = vmatpush.msra.mxu0 %v404
        %425 = vmatpush.msra.mxu0 %v402
        %426 = vmatpush.msra.mxu0 %v400
        %427 = vmatpush.msra.mxu0 %v398
        %428 = vmatpush.msra.mxu0 %v396
        %429 = vmatpush.msra.mxu0 %v394
        %430 = vmatpush.msra.mxu0 %v392
        %431 = vmatpush.msra.mxu0 %v390
        %432 = vmatpush.msra.mxu0 %v388
        %433 = vmatpush.msra.mxu0 %v386
        %434 = vmatpush.msra.mxu0 %v384
        %435 = vmatpush.msra.mxu0 %v382
        %436 = vmatmul.f32.gmra.mxu0 %v381
        %v437 = vpop.f32.mrf.mxu0
        %v438 = vadd.f32 %v416, %v437
        %439 = vdwg.mxu0
        %440 = vmatpush.msra.mxu0 %v413
        %441 = vmatpush.msra.mxu0 %v411
        %442 = vmatpush.msra.mxu0 %v409
        %443 = vmatpush.msra.mxu0 %v407
        %444 = vmatpush.msra.mxu0 %v405
        %445 = vmatpush.msra.mxu0 %v403
        %446 = vmatpush.msra.mxu0 %v401
        %447 = vmatpush.msra.mxu0 %v399
        %448 = vmatpush.msra.mxu0 %v397
        %449 = vmatpush.msra.mxu0 %v395
        %450 = vmatpush.msra.mxu0 %v393
        %451 = vmatpush.msra.mxu0 %v391
        %452 = vmatpush.msra.mxu0 %v389
        %453 = vmatpush.msra.mxu0 %v387
        %454 = vmatpush.msra.mxu0 %v385
        %455 = vmatpush.msra.mxu0 %v383
        %456 = vmatmul.f32.gmra.mxu0 %v381
        %v457 = vpop.f32.mrf.mxu0
        %v458 = vadd.f32 %v417, %v457
        %459 = vdwg.mxu0
        %v460 = vmul.f32 %v438, 0.5
        %v461 = vmul.f32 %v458, 0.5
        %v462 = vmul.f32 %v438, 0.70710677
        %v463 = vmul.f32 %v458, 0.70710677
        %v464 = vmul.f32 %v462, %v462
        %v465 = vmin.f32 16.0, %v464
        %v466 = vmul.f32 %v465, 2.1237322e-06
        %v467 = vadd.f32 %v466, 0.00028619796
        %v468 = vmul.f32 %v465, %v467
        %v469 = vadd.f32 %v468, 0.0036580483
        %v470 = vmul.f32 %v465, %v469
        %v471 = vadd.f32 %v470, 0.05243302
        %v472 = vmul.f32 %v465, %v471
        %v473 = vadd.f32 %v472, 0.18741608
        %v474 = vmul.f32 %v465, %v473
        %v475 = vadd.f32 %v474, 1.1283791
        %v476 = vmul.f32 %v462, %v475
        %v477 = vmul.f32 %v465, 3.8918573e-05
        %v478 = vadd.f32 %v477, 0.001143296
        %v479 = vmul.f32 %v465, %v478
        %v480 = vadd.f32 %v479, 0.014752088
        %v481 = vmul.f32 %v465, %v480
        %v482 = vadd.f32 %v481, 0.112945676
        %v483 = vmul.f32 %v465, %v482
        %v484 = vadd.f32 %v483, 0.4994258
        %v485 = vmul.f32 %v465, %v484
        %v486 = vadd.f32 %v485, 1.0
        %v487 = vrcp.pop %v486
        %v488 = vmul.f32 %v486, %v487
        %v489 = vsub.f32 1.0, %v488
        %v490 = vmul.f32 %v487, %v489
        %v491 = vadd.f32 %v487, %v490
        %vm492 = vweird.f32 %v486
        %vm493 = vweird.f32 %v487
        %vm494 = vmor %vm492, %vm493
        %v495 = vsel %vm494, %v487, %v491
        %v496 = vand.u32 2147483647, %v486
        %vm497 = vcmp.eq.f32.partialorder %v496, 8.507059e+37
        %v498 = vand.u32 %v486, 2147483648
        %v499 = vor.u32 1.1754944e-38, %v498
        %v500 = vsel %vm497, %v499, %v495
        %v501 = vmul.f32 %v476, %v500
        %v502 = vmin.f32 %v501, 1.0
        %v503 = vmax.f32 %v502, -1.0
        %v504 = vmul.f32 %v463, %v463
        %v505 = vmin.f32 16.0, %v504
        %v506 = vmul.f32 %v505, 2.1237322e-06
        %v507 = vadd.f32 %v506, 0.00028619796
        %v508 = vmul.f32 %v505, %v507
        %v509 = vadd.f32 %v508, 0.0036580483
        %v510 = vmul.f32 %v505, %v509
        %v511 = vadd.f32 %v510, 0.05243302
        %v512 = vmul.f32 %v505, %v511
        %v513 = vadd.f32 %v512, 0.18741608
        %v514 = vmul.f32 %v505, %v513
        %v515 = vadd.f32 %v514, 1.1283791
        %v516 = vmul.f32 %v463, %v515
        %v517 = vmul.f32 %v505, 3.8918573e-05
        %v518 = vadd.f32 %v517, 0.001143296
        %v519 = vmul.f32 %v505, %v518
        %v520 = vadd.f32 %v519, 0.014752088
        %v521 = vmul.f32 %v505, %v520
        %v522 = vadd.f32 %v521, 0.112945676
        %v523 = vmul.f32 %v505, %v522
        %v524 = vadd.f32 %v523, 0.4994258
        %v525 = vmul.f32 %v505, %v524
        %v526 = vadd.f32 %v525, 1.0
        %v527 = vrcp.pop %v526
        %v528 = vmul.f32 %v526, %v527
        %v529 = vsub.f32 1.0, %v528
        %v530 = vmul.f32 %v527, %v529
        %v531 = vadd.f32 %v527, %v530
        %vm532 = vweird.f32 %v526
        %vm533 = vweird.f32 %v527
        %vm534 = vmor %vm532, %vm533
        %v535 = vsel %vm534, %v527, %v531
        %v536 = vand.u32 2147483647, %v526
        %vm537 = vcmp.eq.f32.partialorder %v536, 8.507059e+37
        %v538 = vand.u32 %v526, 2147483648
        %v539 = vor.u32 1.1754944e-38, %v538
        %v540 = vsel %vm537, %v539, %v535
        %v541 = vmul.f32 %v516, %v540
        %v542 = vmin.f32 %v541, 1.0
        %v543 = vmax.f32 %v542, -1.0
        %v544 = vadd.f32 %v503, 1.0
        %v545 = vadd.f32 %v543, 1.0
        %v546 = vmul.f32 %v460, %v544
        %v547 = vmul.f32 %v461, %v545
        %v548 = vld [vmem:[#allocation8] sm:$0xff]
        %v549 = vld [vmem:[#allocation8 + $0x8] sm:$0xff]
        %v550 = vld [vmem:[#allocation8 + $0x10] sm:$0xff]
        %v551 = vld [vmem:[#allocation8 + $0x18] sm:$0xff]
        %v552 = vld [vmem:[#allocation8 + $0x20] sm:$0xff]
        %v553 = vld [vmem:[#allocation8 + $0x28] sm:$0xff]
        %v554 = vld [vmem:[#allocation8 + $0x30] sm:$0xff]
        %v555 = vld [vmem:[#allocation8 + $0x38] sm:$0xff]
        %v556 = vld [vmem:[#allocation8 + $0x40] sm:$0xff]
        %v557 = vld [vmem:[#allocation8 + $0x48] sm:$0xff]
        %v558 = vld [vmem:[#allocation8 + $0x50] sm:$0xff]
        %v559 = vld [vmem:[#allocation8 + $0x58] sm:$0xff]
        %v560 = vld [vmem:[#allocation8 + $0x60] sm:$0xff]
        %v561 = vld [vmem:[#allocation8 + $0x68] sm:$0xff]
        %v562 = vld [vmem:[#allocation8 + $0x70] sm:$0xff]
        %v563 = vld [vmem:[#allocation8 + $0x78] sm:$0xff]
        %v564 = vld [vmem:[#allocation8 + $0x80] sm:$0xff]
        %v565 = vld [vmem:[#allocation8 + $0x88] sm:$0xff]
        %v566 = vld [vmem:[#allocation8 + $0x90] sm:$0xff]
        %v567 = vld [vmem:[#allocation8 + $0x98] sm:$0xff]
        %v568 = vld [vmem:[#allocation8 + $0xa0] sm:$0xff]
        %v569 = vld [vmem:[#allocation8 + $0xa8] sm:$0xff]
        %v570 = vld [vmem:[#allocation8 + $0xb0] sm:$0xff]
        %v571 = vld [vmem:[#allocation8 + $0xb8] sm:$0xff]
        %v572 = vld [vmem:[#allocation8 + $0xc0] sm:$0xff]
        %v573 = vld [vmem:[#allocation8 + $0xc8] sm:$0xff]
        %v574 = vld [vmem:[#allocation8 + $0xd0] sm:$0xff]
        %v575 = vld [vmem:[#allocation8 + $0xd8] sm:$0xff]
        %v576 = vld [vmem:[#allocation8 + $0xe0] sm:$0xff]
        %v577 = vld [vmem:[#allocation8 + $0xe8] sm:$0xff]
        %v578 = vld [vmem:[#allocation8 + $0xf0] sm:$0xff]
        %v579 = vld [vmem:[#allocation8 + $0xf8] sm:$0xff]
        %v580 = vld [vmem:[%s6] sm:$0x1]
        %v582 = vperm.slane %v580, 0
        %584 = vmatpush.msra.mxu0 %v563
        %585 = vmatpush.msra.mxu0 %v562
        %586 = vmatpush.msra.mxu0 %v561
        %587 = vmatpush.msra.mxu0 %v560
        %588 = vmatpush.msra.mxu0 %v559
        %589 = vmatpush.msra.mxu0 %v558
        %590 = vmatpush.msra.mxu0 %v557
        %591 = vmatpush.msra.mxu0 %v556
        %592 = vmatpush.msra.mxu0 %v555
        %593 = vmatpush.msra.mxu0 %v554
        %594 = vmatpush.msra.mxu0 %v553
        %595 = vmatpush.msra.mxu0 %v552
        %596 = vmatpush.msra.mxu0 %v551
        %597 = vmatpush.msra.mxu0 %v550
        %598 = vmatpush.msra.mxu0 %v549
        %599 = vmatpush.msra.mxu0 %v548
        %600 = vmatmul.f32.gmra.mxu0 %v546
        %v601 = vpop.f32.mrf.mxu0
        %v602 = vadd.f32 %v582, %v601
        %603 = vdwg.mxu0
        %604 = vmatpush.msra.mxu0 %v579
        %605 = vmatpush.msra.mxu0 %v578
        %606 = vmatpush.msra.mxu0 %v577
        %607 = vmatpush.msra.mxu0 %v576
        %608 = vmatpush.msra.mxu0 %v575
        %609 = vmatpush.msra.mxu0 %v574
        %610 = vmatpush.msra.mxu0 %v573
        %611 = vmatpush.msra.mxu0 %v572
        %612 = vmatpush.msra.mxu0 %v571
        %613 = vmatpush.msra.mxu0 %v570
        %614 = vmatpush.msra.mxu0 %v569
        %615 = vmatpush.msra.mxu0 %v568
        %616 = vmatpush.msra.mxu0 %v567
        %617 = vmatpush.msra.mxu0 %v566
        %618 = vmatpush.msra.mxu0 %v565
        %619 = vmatpush.msra.mxu0 %v564
        %620 = vmatmul.f32.gmra.mxu0 %v547
        %v621 = vpop.f32.mrf.mxu0
        %v622 = vadd.f32 %v602, %v621
        %623 = vdwg.mxu0
        %624 = vst [vmem:[%s343] sm:$0xff] %v622
        %s625 = sand.u32 %s186, 1
        %s626 = scalar_lea.sflag [#allocation4], %s625
        %s627 = sand.u32 %s186, 1
        %s628 = smul.addr %s627, 8
        %s629 = scalar_lea.vmem [#allocation10], %s628
        // Predicated region
        $region65: #{tpu_custom_call.1} parent=47 // pred_check
          %p630 = pneg %p196
        $region66: #{tpu_custom_call.1} parent=47 // pred_check_branch
          %632 = sbr.rel (%p630) target = $region68
        $region67: #{tpu_custom_call.1} parent=47 // pred_region
          %634 = vsyncadd %s626, 0
          %s635 = smul.addr %s26, 8
          %s636 = scalar_lea.hbm %s7, %s635
          %s638 = sshll.u32 %s629, 4
          %s639 = int_to_ptr.vmem [resolvable:$true] %s638
          %s640 = sshll.u32 %s636, 4
          %s641 = int_to_ptr.hbm [resolvable:$true] %s640
          %643 = dma.vmem_to_hbm [thread:$0]  %s639, 128, %s641, %s626
        $region68: #{tpu_custom_call.1} parent=47 // pred_fallthru
          _
      $region48: #{tpu_custom_call.1} parent=5 // pred_fallthru
        _
      %p644 = scmp.le.s32.totalorder 2, %s21
      // Predicated region
      $region69: #{tpu_custom_call.1} parent=5 // pred_check
        %p645 = pneg %p644
      $region70: #{tpu_custom_call.1} parent=5 // pred_check_branch
        %647 = sbr.rel (%p645) target = $region72
      $region71: #{tpu_custom_call.1} parent=5 // pred_region
        %s648 = ssub.s32 %s21, 2
        // Predicated region
        $region73: #{tpu_custom_call.1} parent=71 // pred_check
          %p649 = pneg %p202
        $region74: #{tpu_custom_call.1} parent=71 // pred_check_branch
          %651 = sbr.rel (%p649) target = $region76
        $region75: #{tpu_custom_call.1} parent=71 // pred_region
          %s652 = sand.u32 %s187, 1
          %s653 = scalar_lea.sflag [#allocation4], %s652
          %s654 = sand.u32 %s187, 1
          %s655 = smul.addr %s654, 8
          %s656 = scalar_lea.vmem [#allocation10], %s655
          %658 = dma.done %s653, 128
        $region76: #{tpu_custom_call.1} parent=71 // pred_fallthru
          _
      $region72: #{tpu_custom_call.1} parent=5 // pred_fallthru
        _
    $region6: #{tpu_custom_call.1} parent=1 // loop_footer
      %s25 = sadd.s32 1, %s21
    $region7: #{tpu_custom_call.1} parent=1 // loop_footer_branch
      %20 = sbr.rel target = $region3
    $region8: #{tpu_custom_call.1} parent=1 // loop_exit
      _
    %659 = vsyncpa [#allocation3], 1
    %s660 = scalar_lea.sflag [#allocation3], 1
    %661 = vsyncpa %s660, 1
    %662 = vsyncpa [#allocation6], 1
    %663 = vsyncpa [#allocation9], 1
    %664 = vsyncpa [#allocation4], 1
    %s665 = scalar_lea.sflag [#allocation4], 1
    %666 = vsyncpa %s665, 1

</llo_original>
